<compile_context>
chip_gen: v7x
topology: tpu7x:2x2x1
jax: 0.10.0
libtpu: 0.0.40
codegen_flags: <defaults>
</compile_context>

<pallas_src>
import math
import jax
import jax.numpy as jnp
from jax.experimental import pallas as pl
from jax.experimental.pallas import tpu as pltpu


def _round_up(n, m):
    return ((n + m - 1) // m) * m


# ----------------------------------------------------------------------------
# Kernel
# ----------------------------------------------------------------------------
def tlstm_cell_kernel(xh_ref, t_ref, c_ref,
                      w_xh_ref, b_xh_ref, wc_ref, bc_ref,
                      h_out_ref, c_out_ref):
    Hp = c_ref.shape[1]

    c = c_ref[...]                       # (TB, Hp) f32
    t = t_ref[...]                       # (TB, 1)  f32

    # cs = tanh(c2cs(c)); bf16 MXU matmul, f32 accumulation, bias fused in.
    cs = jnp.tanh(
        jnp.dot(c.astype(jnp.bfloat16), wc_ref[...],
                preferred_element_type=jnp.float32) + bc_ref[...])

    # time decay: c_star = (c - cs) + cs / t, with EUP reciprocal on the
    # (TB, 1) column instead of a broadcast divide over (TB, Hp).
    inv_t = pl.reciprocal(t, approx=True)
    c_star = (c - cs) + cs * inv_t

    # fused i2h + h2h: one (TB, I+H) @ (I+H, 4*Hp) bf16 matmul, f32 accum,
    # pre-summed bias (bi + bh).
    preact = jnp.dot(xh_ref[...], w_xh_ref[...],
                     preferred_element_type=jnp.float32) + b_xh_ref[...]

    # gate slices land on 128-aligned lane boundaries (Hp % 128 == 0).
    gates = jax.nn.sigmoid(preact[:, : 3 * Hp])
    g_t = jnp.tanh(preact[:, 3 * Hp:])
    i_t = gates[:, :Hp]
    f_t = gates[:, Hp: 2 * Hp]
    o_t = gates[:, 2 * Hp: 3 * Hp]

    c_t = c_star * f_t + i_t * g_t
    h_out_ref[...] = o_t * jnp.tanh(c_t)
    c_out_ref[...] = c_t


# ----------------------------------------------------------------------------
# Parameter preparation (done once): fuse, pad per gate block to Hp, cast bf16
# ----------------------------------------------------------------------------
def prepare_params(params):
    wi_t, bi, wh_t, bh, wc_t, bc = params
    H = wc_t.shape[0]
    Hp = _round_up(H, 128)

    def pad_gate_cols(a):                       # (..., 4*H) -> (..., 4*Hp)
        a4 = a.reshape(*a.shape[:-1], 4, H)
        a4 = jnp.pad(a4, [(0, 0)] * (a4.ndim - 1) + [(0, Hp - H)])
        return a4.reshape(*a.shape[:-1], 4 * Hp)

    w_xh = jnp.concatenate([wi_t, wh_t], axis=0)          # (I+H, 4H) f32
    w_xh = pad_gate_cols(w_xh).astype(jnp.bfloat16)       # (I+H, 4Hp) bf16
    b_xh = pad_gate_cols(bi + bh)                         # (1, 4Hp) f32

    wc = jnp.pad(wc_t, ((0, Hp - H), (0, Hp - H))).astype(jnp.bfloat16)
    bcp = jnp.pad(bc, ((0, 0), (0, Hp - H)))              # (1, Hp) f32
    return w_xh, b_xh, wc, bcp, Hp


# ----------------------------------------------------------------------------
# Wrapper
# ----------------------------------------------------------------------------
def tlstm_cell_forward(x, t, h, c, params):
    """Runs TLSTMCell forward. Returns (h_t, (h_t, c_t)) like the PyTorch module."""
    B, H = c.shape
    I = x.shape[1]
    K = I + H

    w_xh, b_xh, wc, bcp, Hp = prepare_params(params)

    # Batch padding / tiling: sublane-aligned, batch tiles pipelined over a
    # "parallel" grid axis while weights stay VMEM-resident.
    Bp = _round_up(max(B, 8), 8)
    if Bp > 256:
        TB = 256
        Bp = _round_up(Bp, TB)
    else:
        TB = Bp

    xh = jnp.concatenate([x, h], axis=1)                           # (B, I+H)
    xh = jnp.pad(xh, ((0, Bp - B), (0, 0))).astype(jnp.bfloat16)   # bf16 input
    cp = jnp.pad(c, ((0, Bp - B), (0, Hp - H)))                    # f32
    tp = jnp.pad(t, ((0, Bp - B), (0, 0)), constant_values=1.0)    # f32, no /0

    grid = (Bp // TB,)

    h_pad, c_pad = pl.pallas_call(
        tlstm_cell_kernel,
        out_shape=(
            jax.ShapeDtypeStruct((Bp, Hp), jnp.float32),
            jax.ShapeDtypeStruct((Bp, Hp), jnp.float32),
        ),
        grid_spec=pltpu.PrefetchScalarGridSpec(
            num_scalar_prefetch=0,
            grid=grid,
            in_specs=[
                pl.BlockSpec((TB, K), lambda i: (i, 0)),         # [x, h] bf16
                pl.BlockSpec((TB, 1), lambda i: (i, 0)),         # t       f32
                pl.BlockSpec((TB, Hp), lambda i: (i, 0)),        # c       f32
                pl.BlockSpec((K, 4 * Hp), lambda i: (0, 0)),     # W_xh    bf16 (resident)
                pl.BlockSpec((1, 4 * Hp), lambda i: (0, 0)),     # bi+bh   f32  (resident)
                pl.BlockSpec((Hp, Hp), lambda i: (0, 0)),        # Wc      bf16 (resident)
                pl.BlockSpec((1, Hp), lambda i: (0, 0)),         # bc      f32  (resident)
            ],
            out_specs=(
                pl.BlockSpec((TB, Hp), lambda i: (i, 0)),
                pl.BlockSpec((TB, Hp), lambda i: (i, 0)),
            ),
        ),
        compiler_params=pltpu.CompilerParams(
            dimension_semantics=("parallel",)),
    )(xh, tp, cp, w_xh, b_xh, wc, bcp)

    h_t = h_pad[:B, :H]
    c_t = c_pad[:B, :H]
    return h_t, (h_t, c_t)


# ----------------------------------------------------------------------------
# Init (matches reset_parameters: uniform(-std, std), std = 1/sqrt(hidden))
# Weights stored pre-transposed (K, N) so the kernel does x @ W_T directly.
# ----------------------------------------------------------------------------
def init_params(key, input_size, hidden_size):
    std = 1.0 / math.sqrt(hidden_size)
    keys = jax.random.split(key, 6)
    wi_t = jax.random.uniform(keys[0], (input_size, 4 * hidden_size),
                              jnp.float32, -std, std)
    bi = jax.random.uniform(keys[1], (1, 4 * hidden_size), jnp.float32, -std, std)
    wh_t = jax.random.uniform(keys[2], (hidden_size, 4 * hidden_size),
                              jnp.float32, -std, std)
    bh = jax.random.uniform(keys[3], (1, 4 * hidden_size), jnp.float32, -std, std)
    wc_t = jax.random.uniform(keys[4], (hidden_size, hidden_size),
                              jnp.float32, -std, std)
    bc = jax.random.uniform(keys[5], (1, hidden_size), jnp.float32, -std, std)
    return wi_t, bi, wh_t, bh, wc_t, bc


# ----------------------------------------------------------------------------
# References
# ----------------------------------------------------------------------------
def reference_forward_f32(x, t, h, c, params):
    """Pure-f32 JAX reference mirroring the PyTorch forward (no dropout)."""
    wi_t, bi, wh_t, bh, wc_t, bc = params
    H = c.shape[1]
    cs = jnp.tanh(c @ wc_t + bc)
    c_star = (c - cs) + cs / t
    preact = x @ wi_t + bi + h @ wh_t + bh
    gates = jax.nn.sigmoid(preact[:, : 3 * H])
    g_t = jnp.tanh(preact[:, 3 * H:])
    i_t, f_t, o_t = gates[:, :H], gates[:, H: 2 * H], gates[:, 2 * H: 3 * H]
    c_t = c_star * f_t + i_t * g_t
    h_t = o_t * jnp.tanh(c_t)
    return h_t, c_t


def reference_forward_bf16(x, t, h, c, params):
    """Reference mirroring the kernel's bf16-matmul / f32-accum numerics."""
    wi_t, bi, wh_t, bh, wc_t, bc = params
    H = c.shape[1]
    cs = jnp.tanh(jnp.dot(c.astype(jnp.bfloat16), wc_t.astype(jnp.bfloat16),
                          preferred_element_type=jnp.float32) + bc)
    c_star = (c - cs) + cs / t
    xh = jnp.concatenate([x, h], axis=1).astype(jnp.bfloat16)
    w = jnp.concatenate([wi_t, wh_t], axis=0).astype(jnp.bfloat16)
    preact = jnp.dot(xh, w, preferred_element_type=jnp.float32) + (bi + bh)
    gates = jax.nn.sigmoid(preact[:, : 3 * H])
    g_t = jnp.tanh(preact[:, 3 * H:])
    i_t, f_t, o_t = gates[:, :H], gates[:, H: 2 * H], gates[:, 2 * H: 3 * H]
    c_t = c_star * f_t + i_t * g_t
    h_t = o_t * jnp.tanh(c_t)
    return h_t, c_t


if __name__ == "__main__":
    B, INPUT, HIDDEN = 4, 16, 32

    key = jax.random.PRNGKey(0)
    k_x, k_h, k_c, k_t, k_p = jax.random.split(key, 5)

    x = jax.random.normal(k_x, (B, INPUT), jnp.float32)
    h = jax.random.normal(k_h, (B, HIDDEN), jnp.float32)
    c = jax.random.normal(k_c, (B, HIDDEN), jnp.float32)
    # elapsed-time divisor, strictly positive
    t = jax.random.uniform(k_t, (B, 1), jnp.float32, 0.5, 3.0)

    params = init_params(k_p, INPUT, HIDDEN)

    h_t, (h_t2, c_t) = tlstm_cell_forward(x, t, h, c, params)
    jax.block_until_ready((h_t, c_t))

    # Tight check against a reference using the same bf16-matmul numerics
    # (slack covers the approx reciprocal and transcendental ULP differences).
    h_ref_b, c_ref_b = reference_forward_bf16(x, t, h, c, params)
    assert jnp.allclose(h_t, h_ref_b, atol=5e-3, rtol=1e-2)
    assert jnp.allclose(c_t, c_ref_b, atol=5e-3, rtol=1e-2)

    # Loose check against the pure-f32 module semantics (bf16 weight rounding).
    h_ref, c_ref = reference_forward_f32(x, t, h, c, params)
    assert jnp.allclose(h_t, h_ref, atol=5e-2, rtol=5e-2)
    assert jnp.allclose(c_t, c_ref, atol=5e-2, rtol=5e-2)

    print("KERNEL_OK")
</pallas_src>

<mosaic_0001>
module attributes {stable_mosaic.version = 11 : i64} {
  func.func @tlstm_cell_kernel(%arg0: i32, %arg1: memref<8x48xbf16, #tpu.memory_space<vmem>>, %arg2: memref<8x1xf32, #tpu.memory_space<vmem>>, %arg3: memref<8x128xf32, #tpu.memory_space<vmem>>, %arg4: memref<48x512xbf16, #tpu.memory_space<vmem>>, %arg5: memref<1x512xf32, #tpu.memory_space<vmem>>, %arg6: memref<128x128xbf16, #tpu.memory_space<vmem>>, %arg7: memref<1x128xf32, #tpu.memory_space<vmem>>, %arg8: memref<8x128xf32, #tpu.memory_space<vmem>>, %arg9: memref<8x128xf32, #tpu.memory_space<vmem>>) attributes {dimension_semantics = [#tpu.dimension_semantics<parallel>], iteration_bounds = array<i64: 1>, scalar_prefetch = 0 : i64, scratch_operands = 0 : i64, tpu.core_type = #tpu.core_type<tc>, window_params = [{transform_indices = @transform_0, window_bounds = array<i64: 8, 48>}, {transform_indices = @transform_1, window_bounds = array<i64: 8, 1>}, {transform_indices = @transform_2, window_bounds = array<i64: 8, 128>}, {pipeline_mode = #tpu.pipeline_mode<synchronous>, transform_indices = @transform_3, window_bounds = array<i64: 48, 512>}, {pipeline_mode = #tpu.pipeline_mode<synchronous>, transform_indices = @transform_4, window_bounds = array<i64: 1, 512>}, {pipeline_mode = #tpu.pipeline_mode<synchronous>, transform_indices = @transform_5, window_bounds = array<i64: 128, 128>}, {pipeline_mode = #tpu.pipeline_mode<synchronous>, transform_indices = @transform_6, window_bounds = array<i64: 1, 128>}, {transform_indices = @transform_7, window_bounds = array<i64: 8, 128>}, {transform_indices = @transform_8, window_bounds = array<i64: 8, 128>}]} {
    %c0 = arith.constant 0 : index
    %c0_0 = arith.constant 0 : index
    %0 = vector.load %arg3[%c0, %c0_0] : memref<8x128xf32, #tpu.memory_space<vmem>>, vector<8x128xf32>
    %c0_1 = arith.constant 0 : index
    %c0_2 = arith.constant 0 : index
    %1 = vector.load %arg2[%c0_1, %c0_2] : memref<8x1xf32, #tpu.memory_space<vmem>>, vector<8x1xf32>
    %2 = arith.truncf %0 : vector<8x128xf32> to vector<8x128xbf16>
    %c0_3 = arith.constant 0 : index
    %c0_4 = arith.constant 0 : index
    %3 = vector.load %arg6[%c0_3, %c0_4] : memref<128x128xbf16, #tpu.memory_space<vmem>>, vector<128x128xbf16>
    %cst = arith.constant dense<0.000000e+00> : vector<8x128xf32>
    %4 = tpu.matmul %2, %3, %cst {dimension_numbers = #tpu.dot_dimension_numbers<[1], [0], [0], [1], [0, 0, 1, 1], [], []>} : vector<8x128xbf16>, vector<128x128xbf16>, vector<8x128xf32> -> vector<8x128xf32>
    %c0_5 = arith.constant 0 : index
    %c0_6 = arith.constant 0 : index
    %5 = vector.load %arg7[%c0_5, %c0_6] : memref<1x128xf32, #tpu.memory_space<vmem>>, vector<1x128xf32>
    %6 = vector.broadcast %5 : vector<1x128xf32> to vector<8x128xf32>
    %7 = arith.addf %4, %6 : vector<8x128xf32>
    %8 = math.tanh %7 : vector<8x128xf32>
    %9 = tpu.reciprocal %1 {approx = true} : vector<8x1xf32> -> vector<8x1xf32>
    %10 = arith.subf %0, %8 : vector<8x128xf32>
    %11 = vector.broadcast %9 : vector<8x1xf32> to vector<8x128xf32>
    %12 = arith.mulf %8, %11 : vector<8x128xf32>
    %13 = arith.addf %10, %12 : vector<8x128xf32>
    %c0_7 = arith.constant 0 : index
    %c0_8 = arith.constant 0 : index
    %14 = vector.load %arg1[%c0_7, %c0_8] : memref<8x48xbf16, #tpu.memory_space<vmem>>, vector<8x48xbf16>
    %c0_9 = arith.constant 0 : index
    %c0_10 = arith.constant 0 : index
    %15 = vector.load %arg4[%c0_9, %c0_10] : memref<48x512xbf16, #tpu.memory_space<vmem>>, vector<48x512xbf16>
    %cst_11 = arith.constant dense<0.000000e+00> : vector<8x512xf32>
    %16 = tpu.matmul %14, %15, %cst_11 {dimension_numbers = #tpu.dot_dimension_numbers<[1], [0], [0], [1], [0, 0, 1, 1], [], []>} : vector<8x48xbf16>, vector<48x512xbf16>, vector<8x512xf32> -> vector<8x512xf32>
    %c0_12 = arith.constant 0 : index
    %c0_13 = arith.constant 0 : index
    %17 = vector.load %arg5[%c0_12, %c0_13] : memref<1x512xf32, #tpu.memory_space<vmem>>, vector<1x512xf32>
    %18 = vector.broadcast %17 : vector<1x512xf32> to vector<8x512xf32>
    %19 = arith.addf %16, %18 : vector<8x512xf32>
    %20 = vector.extract_strided_slice %19 {offsets = [0, 0], sizes = [8, 384], strides = [1, 1]} : vector<8x512xf32> to vector<8x384xf32>
    %21 = arith.negf %20 : vector<8x384xf32>
    %22 = math.exp %21 : vector<8x384xf32>
    %cst_14 = arith.constant 1.000000e+00 : f32
    %23 = vector.broadcast %cst_14 : f32 to vector<8x384xf32>
    %24 = arith.addf %23, %22 : vector<8x384xf32>
    %25 = arith.divf %23, %24 : vector<8x384xf32>
    %26 = vector.extract_strided_slice %19 {offsets = [0, 384], sizes = [8, 128], strides = [1, 1]} : vector<8x512xf32> to vector<8x128xf32>
    %27 = math.tanh %26 : vector<8x128xf32>
    %28 = vector.extract_strided_slice %25 {offsets = [0, 0], sizes = [8, 128], strides = [1, 1]} : vector<8x384xf32> to vector<8x128xf32>
    %29 = vector.extract_strided_slice %25 {offsets = [0, 128], sizes = [8, 128], strides = [1, 1]} : vector<8x384xf32> to vector<8x128xf32>
    %30 = vector.extract_strided_slice %25 {offsets = [0, 256], sizes = [8, 128], strides = [1, 1]} : vector<8x384xf32> to vector<8x128xf32>
    %31 = arith.mulf %13, %29 : vector<8x128xf32>
    %32 = arith.mulf %28, %27 : vector<8x128xf32>
    %33 = arith.addf %31, %32 : vector<8x128xf32>
    %34 = math.tanh %33 : vector<8x128xf32>
    %35 = arith.mulf %30, %34 : vector<8x128xf32>
    %c0_15 = arith.constant 0 : index
    %c0_16 = arith.constant 0 : index
    %36 = vector.load %arg8[%c0_15, %c0_16] : memref<8x128xf32, #tpu.memory_space<vmem>>, vector<8x128xf32>
    tpu.vector_store %arg8[%c0_15, %c0_16], %35 {strides = array<i32>} : memref<8x128xf32, #tpu.memory_space<vmem>>, vector<8x128xf32>,
    %c0_17 = arith.constant 0 : index
    %c0_18 = arith.constant 0 : index
    %37 = vector.load %arg9[%c0_17, %c0_18] : memref<8x128xf32, #tpu.memory_space<vmem>>, vector<8x128xf32>
    tpu.vector_store %arg9[%c0_17, %c0_18], %33 {strides = array<i32>} : memref<8x128xf32, #tpu.memory_space<vmem>>, vector<8x128xf32>,
    return
  }
  func.func @transform_0(%arg0: i32) -> (i32, i32) {
    %c0_i32 = arith.constant 0 : i32
    %c0_i32_0 = arith.constant 0 : i32
    return %arg0, %c0_i32 : i32, i32
  }
  func.func @transform_1(%arg0: i32) -> (i32, i32) {
    %c0_i32 = arith.constant 0 : i32
    %c0_i32_0 = arith.constant 0 : i32
    return %arg0, %c0_i32 : i32, i32
  }
  func.func @transform_2(%arg0: i32) -> (i32, i32) {
    %c0_i32 = arith.constant 0 : i32
    %c0_i32_0 = arith.constant 0 : i32
    return %arg0, %c0_i32 : i32, i32
  }
  func.func @transform_3(%arg0: i32) -> (i32, i32) {
    %c0_i32 = arith.constant 0 : i32
    %c0_i32_0 = arith.constant 0 : i32
    %c0_i32_1 = arith.constant 0 : i32
    return %c0_i32, %c0_i32_0 : i32, i32
  }
  func.func @transform_4(%arg0: i32) -> (i32, i32) {
    %c0_i32 = arith.constant 0 : i32
    %c0_i32_0 = arith.constant 0 : i32
    %c0_i32_1 = arith.constant 0 : i32
    return %c0_i32, %c0_i32_0 : i32, i32
  }
  func.func @transform_5(%arg0: i32) -> (i32, i32) {
    %c0_i32 = arith.constant 0 : i32
    %c0_i32_0 = arith.constant 0 : i32
    %c0_i32_1 = arith.constant 0 : i32
    return %c0_i32, %c0_i32_0 : i32, i32
  }
  func.func @transform_6(%arg0: i32) -> (i32, i32) {
    %c0_i32 = arith.constant 0 : i32
    %c0_i32_0 = arith.constant 0 : i32
    %c0_i32_1 = arith.constant 0 : i32
    return %c0_i32, %c0_i32_0 : i32, i32
  }
  func.func @transform_7(%arg0: i32) -> (i32, i32) {
    %c0_i32 = arith.constant 0 : i32
    %c0_i32_0 = arith.constant 0 : i32
    return %arg0, %c0_i32 : i32, i32
  }
  func.func @transform_8(%arg0: i32) -> (i32, i32) {
    %c0_i32 = arith.constant 0 : i32
    %c0_i32_0 = arith.constant 0 : i32
    return %arg0, %c0_i32 : i32, i32
  }
}

</mosaic_0001>

<llo_original>
// kernel: tpu_custom_call.1
$region0: #{tpu_custom_call.1}
  #allocation0 [shape = 'u32[]', space=smem, size = 0x4, offset = 0x4, fixed_abs, tag = 'smem constant byte address 0x4 - core index']
  #allocation1 [shape = 'u32[144,128]{1,0:T(1,128)}', space=vmem, size = 0x12000, scoped, tag = 'internal scratch']
  %s0 = inlined_call_operand.vmem [shape: bf16[8,48], index: 0, kind: input, shape index: {}]
  %s1 = inlined_call_operand.vmem [shape: f32[8,1], index: 1, kind: input, shape index: {}]
  %s2 = inlined_call_operand.vmem [shape: f32[8,128], index: 2, kind: input, shape index: {}]
  %s3 = inlined_call_operand.hbm [shape: bf16[48,512], index: 3, kind: input, shape index: {}]
  %s4 = inlined_call_operand.vmem [shape: f32[1,512], index: 4, kind: input, shape index: {}]
  %s5 = inlined_call_operand.hbm [shape: bf16[128,128], index: 5, kind: input, shape index: {}]
  %s6 = inlined_call_operand.vmem [shape: f32[1,128], index: 6, kind: input, shape index: {}]
  %s7 = inlined_call_operand.hbm [shape: f32[8,128], index: 7, kind: output, shape index: {0}]
  %s8 = inlined_call_operand.hbm [shape: f32[8,128], index: 8, kind: output, shape index: {1}]
  %9 = xla_tuple %s7, %s8
  %s10 = sld [smem:[#allocation0]]
  $region54: #{tpu_custom_call.1} parent=0
    _
  %s12 = ssub.s32 1, %s10
  %s13 = scalar_select 0, %s12, %s10
  $region1: #{tpu_custom_call.1} parent=0
    #allocation2 [shape = 'u8[49152]{0}', space=vmem, size = 0xc000, scoped, tag = 'input window, operand 3, single buffered']
    #allocation3 [shape = 's32[1]{0}', space=sflag, size = 0x4, scoped, tag = 'scoped memory for tpu_custom_call.1']
    #allocation4 [shape = 's32[1]{0}', space=sflag, size = 0x4, scoped, tag = 'scoped memory for tpu_custom_call.1']
    #allocation5 [shape = 'u8[32768]{0}', space=vmem, size = 0x8000, scoped, tag = 'input window, operand 5, single buffered']
    #allocation6 [shape = 's32[1]{0}', space=sflag, size = 0x4, scoped, tag = 'scoped memory for tpu_custom_call.1']
    #allocation7 [shape = 'u8[4096]{0}', space=vmem, size = 0x1000, scoped, tag = 'output window, operand 0, single buffered']
    #allocation8 [shape = 'u8[4096]{0}', space=vmem, size = 0x1000, scoped, tag = 'output window, operand 1, single buffered']
    #allocation9 [shape = 's32[1]{0}', space=sflag, size = 0x4, scoped, tag = 'scoped memory for tpu_custom_call.1']
    %14 = vsyncpa [#allocation3], 0
    %15 = vsyncpa [#allocation6], 0
    %16 = vsyncpa [#allocation4], 0
    %17 = vsyncpa [#allocation9], 0
    // Predicated region
    $region2: #{tpu_custom_call.1} parent=1 // pred_check
      _
    $region3: #{tpu_custom_call.1} parent=1 // pred_check_branch
      %19 = sbr.rel (0) target = $region5
    $region4: #{tpu_custom_call.1} parent=1 // pred_region
      _
    $region5: #{tpu_custom_call.1} parent=1 // pred_fallthru
      _
    // Predicated region
    $region6: #{tpu_custom_call.1} parent=1 // pred_check
      _
    $region7: #{tpu_custom_call.1} parent=1 // pred_check_branch
      %21 = sbr.rel (0) target = $region9
    $region8: #{tpu_custom_call.1} parent=1 // pred_region
      _
    $region9: #{tpu_custom_call.1} parent=1 // pred_fallthru
      _
    // Predicated region
    $region10: #{tpu_custom_call.1} parent=1 // pred_check
      _
    $region11: #{tpu_custom_call.1} parent=1 // pred_check_branch
      %23 = sbr.rel (0) target = $region13
    $region12: #{tpu_custom_call.1} parent=1 // pred_region
      _
    $region13: #{tpu_custom_call.1} parent=1 // pred_fallthru
      _
    // Predicated region
    $region14: #{tpu_custom_call.1} parent=1 // pred_check
      _
    $region15: #{tpu_custom_call.1} parent=1 // pred_check_branch
      %25 = sbr.rel (0) target = $region17
    $region16: #{tpu_custom_call.1} parent=1 // pred_region
      %s27 = ssub.s32 1536, 1536
      %28 = vsyncadd [#allocation3], %s27
      %s29 = sshll.u32 [#allocation2], 4
      %s30 = int_to_ptr.vmem [resolvable:$true] %s29
      %35 = dma.hbm_to_vmem [thread:$0]  %s3, 1536, %s30, [#allocation3], 256, 256, 16
    $region17: #{tpu_custom_call.1} parent=1 // pred_fallthru
      _
    // Predicated region
    $region18: #{tpu_custom_call.1} parent=1 // pred_check
      _
    $region19: #{tpu_custom_call.1} parent=1 // pred_check_branch
      %37 = sbr.rel (0) target = $region21
    $region20: #{tpu_custom_call.1} parent=1 // pred_region
      _
    $region21: #{tpu_custom_call.1} parent=1 // pred_fallthru
      _
    // Predicated region
    $region22: #{tpu_custom_call.1} parent=1 // pred_check
      _
    $region23: #{tpu_custom_call.1} parent=1 // pred_check_branch
      %39 = sbr.rel (0) target = $region25
    $region24: #{tpu_custom_call.1} parent=1 // pred_region
      %s41 = ssub.s32 1024, 1024
      %42 = vsyncadd [#allocation6], %s41
      %s43 = sshll.u32 [#allocation5], 4
      %s44 = int_to_ptr.vmem [resolvable:$true] %s43
      %49 = dma.hbm_to_vmem [thread:$0]  %s5, 1024, %s44, [#allocation6], 64, 64, 4
    $region25: #{tpu_custom_call.1} parent=1 // pred_fallthru
      _
    // Predicated region
    $region26: #{tpu_custom_call.1} parent=1 // pred_check
      _
    $region27: #{tpu_custom_call.1} parent=1 // pred_check_branch
      %51 = sbr.rel (0) target = $region29
    $region28: #{tpu_custom_call.1} parent=1 // pred_region
      _
    $region29: #{tpu_custom_call.1} parent=1 // pred_fallthru
      _
    // Predicated region
    $region30: #{tpu_custom_call.1} parent=1 // pred_check
      _
    $region31: #{tpu_custom_call.1} parent=1 // pred_check_branch
      %53 = sbr.rel (0) target = $region33
    $region32: #{tpu_custom_call.1} parent=1 // pred_region
      %54 = dma.done [#allocation3], 1536
    $region33: #{tpu_custom_call.1} parent=1 // pred_fallthru
      _
    // Predicated region
    $region34: #{tpu_custom_call.1} parent=1 // pred_check
      _
    $region35: #{tpu_custom_call.1} parent=1 // pred_check_branch
      %56 = sbr.rel (0) target = $region37
    $region36: #{tpu_custom_call.1} parent=1 // pred_region
      %57 = dma.done [#allocation6], 1024
    $region37: #{tpu_custom_call.1} parent=1 // pred_fallthru
      _
    %v59 = vld [vmem:[%s2] sm:$0xff]
    %v60 = vld [vmem:[%s1] sm:$0xff]
    %v61 = vpack.c.bf16 %v59, %v59
    %v62 = vld [vmem:[#allocation5] sm:$0xf]
    %v63 = vld [vmem:[#allocation5 + $0x4] sm:$0xf]
    %v64 = vld [vmem:[#allocation5 + $0x8] sm:$0xf]
    %v65 = vld [vmem:[#allocation5 + $0xc] sm:$0xf]
    %v66 = vld [vmem:[#allocation5 + $0x10] sm:$0xf]
    %v67 = vld [vmem:[#allocation5 + $0x14] sm:$0xf]
    %v68 = vld [vmem:[#allocation5 + $0x18] sm:$0xf]
    %v69 = vld [vmem:[#allocation5 + $0x1c] sm:$0xf]
    %v70 = vld [vmem:[#allocation5 + $0x20] sm:$0xf]
    %v71 = vld [vmem:[#allocation5 + $0x24] sm:$0xf]
    %v72 = vld [vmem:[#allocation5 + $0x28] sm:$0xf]
    %v73 = vld [vmem:[#allocation5 + $0x2c] sm:$0xf]
    %v74 = vld [vmem:[#allocation5 + $0x30] sm:$0xf]
    %v75 = vld [vmem:[#allocation5 + $0x34] sm:$0xf]
    %v76 = vld [vmem:[#allocation5 + $0x38] sm:$0xf]
    %v77 = vld [vmem:[#allocation5 + $0x3c] sm:$0xf]
    %v78 = vld [vmem:[%s6] sm:$0x1]
    %v80 = vlaneseq
    %v81 = vshrl.u32 %v80, 7
    %v82 = vsub.s32 0, %v81
    %v83 = vrot.slane %v78, %v82
    %v101 = vunpack.c.l.b16 %v62
    %v102 = vunpack.c.l.b16 %v63
    %v103 = vunpack.c.l.b16 %v64
    %v104 = vunpack.c.l.b16 %v65
    %v105 = vunpack.c.l.b16 %v66
    %v106 = vunpack.c.l.b16 %v67
    %v107 = vunpack.c.l.b16 %v68
    %v108 = vunpack.c.l.b16 %v69
    %v109 = vunpack.c.l.b16 %v70
    %v110 = vunpack.c.l.b16 %v71
    %v111 = vunpack.c.l.b16 %v72
    %v112 = vunpack.c.l.b16 %v73
    %v113 = vunpack.c.l.b16 %v74
    %v114 = vunpack.c.l.b16 %v75
    %v115 = vunpack.c.l.b16 %v76
    %v116 = vunpack.c.l.b16 %v77
    %v117 = vpack.c.b16 %v102, %v101
    %v118 = vpack.c.b16 %v104, %v103
    %v119 = vpack.c.b16 %v106, %v105
    %v120 = vpack.c.b16 %v108, %v107
    %v121 = vpack.c.b16 %v110, %v109
    %v122 = vpack.c.b16 %v112, %v111
    %v123 = vpack.c.b16 %v114, %v113
    %v124 = vpack.c.b16 %v116, %v115
    %133 = vmatprep.subr.bf16.mxu0 0
    %134 = vmatpush1.bf16.msra.mxu0 %v117
    %135 = vmatprep.subr.bf16.mxu0 0
    %136 = vmatpush1.bf16.msra.mxu0 %v118
    %137 = vmatprep.subr.bf16.mxu0 0
    %138 = vmatpush1.bf16.msra.mxu0 %v119
    %139 = vmatprep.subr.bf16.mxu0 0
    %140 = vmatpush1.bf16.msra.mxu0 %v120
    %141 = vmatprep.subr.bf16.mxu0 0
    %142 = vmatpush1.bf16.msra.mxu0 %v121
    %143 = vmatprep.subr.bf16.mxu0 0
    %144 = vmatpush1.bf16.msra.mxu0 %v122
    %145 = vmatprep.subr.bf16.mxu0 0
    %146 = vmatpush1.bf16.msra.mxu0 %v123
    %147 = vmatprep.subr.bf16.mxu0 0
    %148 = vmatpush1.bf16.msra.mxu0 %v124
    %149 = vmatprep.subr.bf16.mxu0 0
    %150 = vmatpush1.bf16.msra.mxu0 0
    %151 = vmatprep.subr.bf16.mxu0 0
    %152 = vmatpush1.bf16.msra.mxu0 0
    %153 = vmatprep.subr.bf16.mxu0 0
    %154 = vmatpush1.bf16.msra.mxu0 0
    %155 = vmatprep.subr.bf16.mxu0 0
    %156 = vmatpush1.bf16.msra.mxu0 0
    %157 = vmatprep.subr.bf16.mxu0 0
    %158 = vmatpush1.bf16.msra.mxu0 0
    %159 = vmatprep.subr.bf16.mxu0 0
    %160 = vmatpush1.bf16.msra.mxu0 0
    %161 = vmatprep.subr.bf16.mxu0 0
    %162 = vmatpush1.bf16.msra.mxu0 0
    %163 = vmatprep.subr.bf16.mxu0 0
    %164 = vmatpush1.bf16.msra.mxu0 0
    %165 = vmatprep.mubr.bf16.mxu0 0
    %166 = vmatmul.mubr.bf16.gmra.mrb[0].mxu0 %v61
    %v167 = vpop.f32.mrb[0].mxu0
    %v168 = vadd.f32 %v83, %v167
    %v169 = vpop.f32.mrb[0].mxu0
    %v170 = vpop.f32.mrb[0].mxu0
    %v171 = vpop.f32.mrb[0].mxu0
    %172 = vdwg.mxu0
    %v173 = vtanh.pop %v168
    %v174 = vrcp.pop %v60
    %v175 = vsub.f32 %v59, %v173
    %177 = vset.pattern.permute.xlu0 0
    %178 = vperm.xlu0 %177, %v174
    %v179 = vpop.permute.xlu0 %178
    %v181 = vmul.f32 %v173, %v179
    %v182 = vadd.f32 %v175, %v181
    %v183 = vld [vmem:[%s0] sm:$0xf]
    %v184 = vld [vmem:[#allocation2] sm:$0xff]
    %v185 = vld [vmem:[#allocation2 + $0x8] sm:$0xff]
    %v186 = vld [vmem:[#allocation2 + $0x10] sm:$0xff]
    %v187 = vld [vmem:[#allocation2 + $0x18] sm:$0xff]
    %v188 = vld [vmem:[#allocation2 + $0x20] sm:$0xff]
    %v189 = vld [vmem:[#allocation2 + $0x28] sm:$0xff]
    %v190 = vld [vmem:[#allocation2 + $0x30] sm:$0xff]
    %v191 = vld [vmem:[#allocation2 + $0x38] sm:$0xff]
    %v192 = vld [vmem:[#allocation2 + $0x40] sm:$0xff]
    %v193 = vld [vmem:[#allocation2 + $0x48] sm:$0xff]
    %v194 = vld [vmem:[#allocation2 + $0x50] sm:$0xff]
    %v195 = vld [vmem:[#allocation2 + $0x58] sm:$0xff]
    %v196 = vld [vmem:[%s4] sm:$0xf]
    %v198 = vlaneseq
    %v199 = vshrl.u32 %v198, 7
    %v200 = vsub.s32 0, %v199
    %v201 = vrot.slane %v196, %v200
    %v202 = vlaneseq
    %v203 = vshrl.u32 %v202, 7
    %v204 = vsub.s32 1, %v203
    %v205 = vrot.slane %v196, %v204
    %v206 = vlaneseq
    %v207 = vshrl.u32 %v206, 7
    %v208 = vsub.s32 2, %v207
    %v209 = vrot.slane %v196, %v208
    %v210 = vlaneseq
    %v211 = vshrl.u32 %v210, 7
    %v212 = vsub.s32 3, %v211
    %v213 = vrot.slane %v196, %v212
    %v230 = vunpack.c.l.b16 %v184
    %v231 = vunpack.c.h.b16 %v184
    %v232 = vunpack.c.l.b16 %v185
    %v233 = vunpack.c.h.b16 %v185
    %v234 = vunpack.c.l.b16 %v186
    %v235 = vunpack.c.h.b16 %v186
    %v236 = vunpack.c.l.b16 %v187
    %v237 = vunpack.c.h.b16 %v187
    %v238 = vunpack.c.l.b16 %v188
    %v239 = vunpack.c.h.b16 %v188
    %v240 = vunpack.c.l.b16 %v189
    %v241 = vunpack.c.h.b16 %v189
    %v242 = vunpack.c.l.b16 %v190
    %v243 = vunpack.c.h.b16 %v190
    %v244 = vunpack.c.l.b16 %v191
    %v245 = vunpack.c.h.b16 %v191
    %v246 = vunpack.c.l.b16 %v192
    %v247 = vunpack.c.h.b16 %v192
    %v248 = vunpack.c.l.b16 %v193
    %v249 = vunpack.c.h.b16 %v193
    %v250 = vunpack.c.l.b16 %v194
    %v251 = vunpack.c.h.b16 %v194
    %v252 = vunpack.c.l.b16 %v195
    %v253 = vunpack.c.h.b16 %v195
    %v254 = vpack.c.b16 %v234, %v230
    %v255 = vpack.c.b16 %v235, %v231
    %v256 = vpack.c.b16 %v236, %v232
    %v257 = vpack.c.b16 %v237, %v233
    %v258 = vpack.c.b16 %v242, %v238
    %v259 = vpack.c.b16 %v243, %v239
    %v260 = vpack.c.b16 %v244, %v240
    %v261 = vpack.c.b16 %v245, %v241
    %v262 = vpack.c.b16 %v250, %v246
    %v263 = vpack.c.b16 %v251, %v247
    %v264 = vpack.c.b16 %v252, %v248
    %v265 = vpack.c.b16 %v253, %v249
    %vm278 = vcmask 392192
    %v280 = vsel %vm278, %v183, 0
    %282 = vmatprep.subr.bf16.mxu0 %v255
    %283 = vmatpush1.bf16.msra.mxu0 %v254
    %284 = vmatprep.subr.bf16.mxu0 %v259
    %285 = vmatpush1.bf16.msra.mxu0 %v258
    %286 = vmatprep.subr.bf16.mxu0 %v263
    %287 = vmatpush1.bf16.msra.mxu0 %v262
    %288 = vmatprep.subr.bf16.mxu0 0
    %289 = vmatpush1.bf16.msra.mxu0 0
    %290 = vmatprep.subr.bf16.mxu0 0
    %291 = vmatpush1.bf16.msra.mxu0 0
    %292 = vmatprep.subr.bf16.mxu0 0
    %293 = vmatpush1.bf16.msra.mxu0 0
    %294 = vmatprep.subr.bf16.mxu0 0
    %295 = vmatpush1.bf16.msra.mxu0 0
    %296 = vmatprep.subr.bf16.mxu0 0
    %297 = vmatpush1.bf16.msra.mxu0 0
    %298 = vmatprep.subr.bf16.mxu0 0
    %299 = vmatpush1.bf16.msra.mxu0 0
    %300 = vmatprep.subr.bf16.mxu0 0
    %301 = vmatpush1.bf16.msra.mxu0 0
    %302 = vmatprep.subr.bf16.mxu0 0
    %303 = vmatpush1.bf16.msra.mxu0 0
    %304 = vmatprep.subr.bf16.mxu0 0
    %305 = vmatpush1.bf16.msra.mxu0 0
    %306 = vmatprep.subr.bf16.mxu0 0
    %307 = vmatpush1.bf16.msra.mxu0 0
    %308 = vmatprep.subr.bf16.mxu0 0
    %309 = vmatpush1.bf16.msra.mxu0 0
    %310 = vmatprep.subr.bf16.mxu0 0
    %311 = vmatpush1.bf16.msra.mxu0 0
    %312 = vmatprep.subr.bf16.mxu0 0
    %313 = vmatpush1.bf16.msra.mxu0 0
    %314 = vmatprep.mubr.bf16.mxu0 0
    %315 = vmatmul.mubr.bf16.gmra.mrb[0].mxu0 %v280
    %v316 = vpop.f32.mrb[0].mxu0
    %v317 = vadd.f32 %v201, %v316
    %v318 = vpop.f32.mrb[0].mxu0
    %v319 = vadd.f32 %v205, %v318
    %v320 = vpop.f32.mrb[0].mxu0
    %v321 = vpop.f32.mrb[0].mxu0
    %322 = vdwg.mxu0
    %323 = vmatprep.subr.bf16.mxu0 %v257
    %324 = vmatpush1.bf16.msra.mxu0 %v256
    %325 = vmatprep.subr.bf16.mxu0 %v261
    %326 = vmatpush1.bf16.msra.mxu0 %v260
    %327 = vmatprep.subr.bf16.mxu0 %v265
    %328 = vmatpush1.bf16.msra.mxu0 %v264
    %329 = vmatprep.subr.bf16.mxu0 0
    %330 = vmatpush1.bf16.msra.mxu0 0
    %331 = vmatprep.subr.bf16.mxu0 0
    %332 = vmatpush1.bf16.msra.mxu0 0
    %333 = vmatprep.subr.bf16.mxu0 0
    %334 = vmatpush1.bf16.msra.mxu0 0
    %335 = vmatprep.subr.bf16.mxu0 0
    %336 = vmatpush1.bf16.msra.mxu0 0
    %337 = vmatprep.subr.bf16.mxu0 0
    %338 = vmatpush1.bf16.msra.mxu0 0
    %339 = vmatprep.subr.bf16.mxu0 0
    %340 = vmatpush1.bf16.msra.mxu0 0
    %341 = vmatprep.subr.bf16.mxu0 0
    %342 = vmatpush1.bf16.msra.mxu0 0
    %343 = vmatprep.subr.bf16.mxu0 0
    %344 = vmatpush1.bf16.msra.mxu0 0
    %345 = vmatprep.subr.bf16.mxu0 0
    %346 = vmatpush1.bf16.msra.mxu0 0
    %347 = vmatprep.subr.bf16.mxu0 0
    %348 = vmatpush1.bf16.msra.mxu0 0
    %349 = vmatprep.subr.bf16.mxu0 0
    %350 = vmatpush1.bf16.msra.mxu0 0
    %351 = vmatprep.subr.bf16.mxu0 0
    %352 = vmatpush1.bf16.msra.mxu0 0
    %353 = vmatprep.subr.bf16.mxu0 0
    %354 = vmatpush1.bf16.msra.mxu0 0
    %355 = vmatprep.mubr.bf16.mxu0 0
    %356 = vmatmul.mubr.bf16.gmra.mrb[0].mxu0 %v280
    %v357 = vpop.f32.mrb[0].mxu0
    %v358 = vadd.f32 %v209, %v357
    %v359 = vpop.f32.mrb[0].mxu0
    %v360 = vadd.f32 %v213, %v359
    %v361 = vpop.f32.mrb[0].mxu0
    %v362 = vpop.f32.mrb[0].mxu0
    %363 = vdwg.mxu0
    %v364 = vxor.u32 %v317, 2147483648
    %v365 = vxor.u32 %v319, 2147483648
    %v366 = vxor.u32 %v358, 2147483648
    %v367 = vmul.f32 %v364, 1.442695
    %v368 = vpow.pop %v367
    %v369 = vmul.f32 %v365, 1.442695
    %v370 = vpow.pop %v369
    %v371 = vmul.f32 %v366, 1.442695
    %v372 = vpow.pop %v371
    %v373 = vadd.f32 %v368, 1.0
    %v374 = vadd.f32 %v370, 1.0
    %v375 = vadd.f32 %v372, 1.0
    %v376 = vrcp.pop %v373
    %v377 = vmul.f32 1.0, %v376
    %v378 = vrcp.pop %v374
    %v379 = vmul.f32 1.0, %v378
    %v380 = vrcp.pop %v375
    %v381 = vmul.f32 1.0, %v380
    %v382 = vtanh.pop %v360
    %v383 = vmul.f32 %v182, %v379
    %v384 = vmul.f32 %v377, %v382
    %v385 = vadd.f32 %v383, %v384
    %v386 = vtanh.pop %v385
    %v387 = vmul.f32 %v381, %v386
    %388 = vst [vmem:[#allocation7] sm:$0xff] %v387
    %389 = vst [vmem:[#allocation8] sm:$0xff] %v385
    // Predicated region
    $region38: #{tpu_custom_call.1} parent=1 // pred_check
      _
    $region39: #{tpu_custom_call.1} parent=1 // pred_check_branch
      %391 = sbr.rel (0) target = $region41
    $region40: #{tpu_custom_call.1} parent=1 // pred_region
      %s393 = ssub.s32 128, 128
      %394 = vsyncadd [#allocation4], %s393
      %s396 = sshll.u32 [#allocation7], 4
      %s397 = int_to_ptr.vmem [resolvable:$true] %s396
      %399 = dma.vmem_to_hbm [thread:$0]  %s397, 128, %s7, [#allocation4]
    $region41: #{tpu_custom_call.1} parent=1 // pred_fallthru
      _
    // Predicated region
    $region42: #{tpu_custom_call.1} parent=1 // pred_check
      _
    $region43: #{tpu_custom_call.1} parent=1 // pred_check_branch
      %401 = sbr.rel (0) target = $region45
    $region44: #{tpu_custom_call.1} parent=1 // pred_region
      %s403 = ssub.s32 128, 128
      %404 = vsyncadd [#allocation9], %s403
      %s406 = sshll.u32 [#allocation8], 4
      %s407 = int_to_ptr.vmem [resolvable:$true] %s406
      %409 = dma.vmem_to_hbm [thread:$0]  %s407, 128, %s8, [#allocation9]
    $region45: #{tpu_custom_call.1} parent=1 // pred_fallthru
      _
    // Predicated region
    $region46: #{tpu_custom_call.1} parent=1 // pred_check
      _
    $region47: #{tpu_custom_call.1} parent=1 // pred_check_branch
      %411 = sbr.rel (0) target = $region49
    $region48: #{tpu_custom_call.1} parent=1 // pred_region
      %412 = dma.done [#allocation4], 128
    $region49: #{tpu_custom_call.1} parent=1 // pred_fallthru
      _
    // Predicated region
    $region50: #{tpu_custom_call.1} parent=1 // pred_check
      _
    $region51: #{tpu_custom_call.1} parent=1 // pred_check_branch
      %414 = sbr.rel (0) target = $region53
    $region52: #{tpu_custom_call.1} parent=1 // pred_region
      %415 = dma.done [#allocation9], 128
    $region53: #{tpu_custom_call.1} parent=1 // pred_fallthru
      _
    %416 = vsyncpa [#allocation3], 1
    %417 = vsyncpa [#allocation6], 1
    %418 = vsyncpa [#allocation4], 1
    %419 = vsyncpa [#allocation9], 1

</llo_original>
